<compile_context>
chip_gen: v6e
topology: v6e:2x2x1
jax: 0.10.0
libtpu: 0.0.40
codegen_flags: <defaults>
</compile_context>

<pallas_src>
import functools
import inspect

import jax
import jax.numpy as jnp
from jax.experimental import pallas as pl
from jax.experimental.pallas import tpu as pltpu

LN_EPS = 1e-5


def _round_up(x, m):
    return ((x + m - 1) // m) * m


def _supports_pipeline_mode():
    if not hasattr(pl, "Buffered"):
        return False
    try:
        return "pipeline_mode" in inspect.signature(pl.BlockSpec).parameters
    except (TypeError, ValueError):
        return False


_HAS_PIPELINE_MODE = _supports_pipeline_mode()


def _resident_spec(shape):
    """Grid-invariant block (weights / LN vectors): constant index_map keeps
    the fetched block resident; single-buffer it when the API allows."""
    idx = lambda i: (0,) * len(shape)
    if _HAS_PIPELINE_MODE:
        return pl.BlockSpec(shape, idx, pipeline_mode=pl.Buffered(1))
    return pl.BlockSpec(shape, idx)


def _smt_kernel(s_ref, w1_ref, b1_ref, w2_ref, b2_ref, w3_ref, b3_ref,
                g_ref, beta_ref, o_ref):
    # s_ref: (TM, C) tile of rows in the caller's dtype.
    # w*_ref: (C, C) bf16.  b*/g/beta: (1, C) f32.
    x = s_ref[...].astype(jnp.float32)

    b1 = b1_ref[...]
    b2 = b2_ref[...]
    b3 = b3_ref[...]
    gamma = g_ref[...]
    beta = beta_ref[...]

    # Three MXU matmuls: bf16 inputs, f32 accumulation; ReLUs on the VPU.
    h = jnp.dot(x.astype(jnp.bfloat16), w1_ref[...],
                preferred_element_type=jnp.float32) + b1
    h = jnp.maximum(h, 0.0)
    h = jnp.dot(h.astype(jnp.bfloat16), w2_ref[...],
                preferred_element_type=jnp.float32) + b2
    h = jnp.maximum(h, 0.0)
    h = jnp.dot(h.astype(jnp.bfloat16), w3_ref[...],
                preferred_element_type=jnp.float32) + b3

    # Residual in f32.
    h = h + x

    # LayerNorm over the (un-padded) feature dim — no masking required.
    inv_c = 1.0 / h.shape[-1]
    mean = jnp.sum(h, axis=-1, keepdims=True) * inv_c
    centered = h - mean
    var = jnp.sum(centered * centered, axis=-1, keepdims=True) * inv_c
    y = centered * jax.lax.rsqrt(var + LN_EPS) * gamma + beta

    o_ref[...] = y.astype(o_ref.dtype)


@functools.partial(jax.jit, static_argnames=("tm",))
def structure_module_transition(s, params, tm=1024):
    """s: (..., C). Returns the same shape and dtype as s."""
    w1, b1, w2, b2, w3, b3, gamma, beta = params
    c = s.shape[-1]
    orig_shape = s.shape

    # Row-major flatten is a view — no extra HBM pass, no dtype change.
    s2d = s.reshape(-1, c)
    n = s2d.shape[0]

    # Large row tile to amortize per-step overhead, but make sure the grid
    # has at least 2 steps whenever possible (v7x megacore split); second-to-
    # last block dim must be a multiple of 8 or the full dim.
    if n <= 8:
        tm_eff = n                      # full dim, single step
    else:
        tm_eff = max(8, min(tm, _round_up(pl.cdiv(n, 2), 8)))
    grid = (pl.cdiv(n, tm_eff),)

    # Small, one-pass parameter prep (params are tiny vs. activations).
    def prep_w(w):
        return w.astype(jnp.bfloat16)

    def prep_v(v):
        return v.reshape(1, c).astype(jnp.float32)

    w1p, w2p, w3p = prep_w(w1), prep_w(w2), prep_w(w3)
    b1p, b2p, b3p = prep_v(b1), prep_v(b2), prep_v(b3)
    gp, betap = prep_v(gamma), prep_v(beta)

    row_spec = pl.BlockSpec((tm_eff, c), lambda i: (i, 0))
    w_spec = _resident_spec((c, c))
    v_spec = _resident_spec((1, c))

    # VMEM budget: double-buffered in/out row tiles + (conservatively
    # double-buffered) weights/vectors + in-kernel temporaries (h in f32,
    # bf16 copies, centered), with 2x headroom, capped at 48 MiB so v7x
    # (64 MiB physical per TC) keeps Mosaic scratch headroom.
    act_itemsize = jnp.dtype(s.dtype).itemsize
    est = (2 * 2 * tm_eff * c * act_itemsize      # in + out tiles, 2 bufs each
           + 2 * (3 * c * c * 2 + 5 * c * 4)      # bf16 weights + f32 vectors
           + 6 * tm_eff * c * 4)                  # in-kernel intermediates
    vmem_limit = int(min(48 * 2**20, max(32 * 2**20, 2 * est)))

    out = pl.pallas_call(
        _smt_kernel,
        out_shape=jax.ShapeDtypeStruct((n, c), s.dtype),
        grid_spec=pltpu.PrefetchScalarGridSpec(
            num_scalar_prefetch=0,
            grid=grid,
            in_specs=[row_spec, w_spec, v_spec, w_spec, v_spec,
                      w_spec, v_spec, v_spec, v_spec],
            out_specs=row_spec,
        ),
        compiler_params=pltpu.CompilerParams(
            dimension_semantics=("parallel",),
            vmem_limit_bytes=vmem_limit),
    )(s2d, w1p, b1p, w2p, b2p, w3p, b3p, gp, betap)

    return out.reshape(orig_shape)


def init_params(key, c):
    """Deterministic parameter init mirroring the module's __init__.

    linear_1 / linear_2: init='relu'  -> He (kaiming) normal, zero bias
    linear_3:            init='final' -> zero weight, zero bias
    LayerNorm:           gamma=1, beta=0
    Weights stored as (in, out) so the kernel computes x @ W.
    """
    k1, k2 = jax.random.split(key)
    he = jnp.sqrt(2.0 / c)
    w1 = jax.random.normal(k1, (c, c), jnp.float32) * he
    b1 = jnp.zeros((1, c), jnp.float32)
    w2 = jax.random.normal(k2, (c, c), jnp.float32) * he
    b2 = jnp.zeros((1, c), jnp.float32)
    w3 = jnp.zeros((c, c), jnp.float32)   # 'final' init
    b3 = jnp.zeros((1, c), jnp.float32)
    gamma = jnp.ones((1, c), jnp.float32)
    beta = jnp.zeros((1, c), jnp.float32)
    return (w1, b1, w2, b2, w3, b3, gamma, beta)


def random_params(key, c):
    """Fully random params to exercise the complete matmul path."""
    ks = jax.random.split(key, 8)
    sc = 1.0 / jnp.sqrt(c)
    w1 = jax.random.normal(ks[0], (c, c), jnp.float32) * sc
    b1 = jax.random.normal(ks[1], (1, c), jnp.float32) * 0.1
    w2 = jax.random.normal(ks[2], (c, c), jnp.float32) * sc
    b2 = jax.random.normal(ks[3], (1, c), jnp.float32) * 0.1
    w3 = jax.random.normal(ks[4], (c, c), jnp.float32) * sc
    b3 = jax.random.normal(ks[5], (1, c), jnp.float32) * 0.1
    gamma = 1.0 + 0.1 * jax.random.normal(ks[6], (1, c), jnp.float32)
    beta = 0.1 * jax.random.normal(ks[7], (1, c), jnp.float32)
    return (w1, b1, w2, b2, w3, b3, gamma, beta)


def reference(s, params, matmul_dtype=jnp.float32):
    """Pure-JAX reference. matmul_dtype lets us match the kernel's bf16 MXU
    inputs (accumulation stays f32) for apples-to-apples validation."""
    w1, b1, w2, b2, w3, b3, gamma, beta = params
    x = s.astype(jnp.float32)

    def mm(a, w):
        return jnp.dot(a.astype(matmul_dtype), w.astype(matmul_dtype),
                       preferred_element_type=jnp.float32)

    h = jnp.maximum(mm(x, w1) + b1, 0.0)
    h = jnp.maximum(mm(h, w2) + b2, 0.0)
    h = mm(h, w3) + b3
    h = h + x
    mean = jnp.mean(h, axis=-1, keepdims=True)
    var = jnp.mean((h - mean) ** 2, axis=-1, keepdims=True)
    return ((h - mean) * jax.lax.rsqrt(var + LN_EPS) * gamma + beta).astype(s.dtype)


if __name__ == "__main__":
    key = jax.random.PRNGKey(0)
    k_x, k_p, k_p2 = jax.random.split(key, 3)

    batch, seq, c = 2, 8, 32          # s: [B, S, C]
    s = jax.random.normal(k_x, (batch, seq, c), jnp.float32)

    # 1) Faithful module init (linear_3 'final' -> zero weights): strict check.
    params = init_params(k_p, c)
    out = jax.block_until_ready(structure_module_transition(s, params))
    ref = reference(s, params)
    assert out.shape == s.shape and out.dtype == s.dtype
    assert jnp.allclose(out, ref, atol=1e-4, rtol=1e-4), "mismatch (module init)"

    # 2) Fully random params: exercises all three matmuls; compare against a
    #    reference using the same bf16-input / f32-accumulate matmul precision.
    params_rand = random_params(k_p2, c)
    out2 = jax.block_until_ready(structure_module_transition(s, params_rand))
    ref2 = reference(s, params_rand, matmul_dtype=jnp.bfloat16)
    assert jnp.allclose(out2, ref2, atol=1e-2, rtol=1e-2), "mismatch (random params)"

    # 3) Native bf16 activation I/O path (no wrapper-side dtype pass).
    s_bf16 = s.astype(jnp.bfloat16)
    out3 = jax.block_until_ready(structure_module_transition(s_bf16, params_rand))
    ref3 = reference(s_bf16.astype(jnp.float32), params_rand,
                     matmul_dtype=jnp.bfloat16)
    assert out3.shape == s.shape and out3.dtype == jnp.bfloat16
    assert jnp.allclose(out3.astype(jnp.float32), ref3, atol=0.1, rtol=0.1), \
        "mismatch (bf16 I/O)"

    print("KERNEL_OK")
</pallas_src>

<mosaic_0001>
module attributes {stable_mosaic.version = 11 : i64} {
  func.func @_smt_kernel(%arg0: i32, %arg1: memref<8x32xf32, #tpu.memory_space<vmem>>, %arg2: memref<32x32xbf16, #tpu.memory_space<vmem>>, %arg3: memref<1x32xf32, #tpu.memory_space<vmem>>, %arg4: memref<32x32xbf16, #tpu.memory_space<vmem>>, %arg5: memref<1x32xf32, #tpu.memory_space<vmem>>, %arg6: memref<32x32xbf16, #tpu.memory_space<vmem>>, %arg7: memref<1x32xf32, #tpu.memory_space<vmem>>, %arg8: memref<1x32xf32, #tpu.memory_space<vmem>>, %arg9: memref<1x32xf32, #tpu.memory_space<vmem>>, %arg10: memref<8x32xf32, #tpu.memory_space<vmem>>) attributes {dimension_semantics = [#tpu.dimension_semantics<parallel>], iteration_bounds = array<i64: 2>, scalar_prefetch = 0 : i64, scratch_operands = 0 : i64, tpu.core_type = #tpu.core_type<tc>, window_params = [{transform_indices = @transform_0, window_bounds = array<i64: 8, 32>}, {pipeline_mode = #tpu.pipeline_mode<synchronous>, transform_indices = @transform_1, window_bounds = array<i64: 32, 32>}, {pipeline_mode = #tpu.pipeline_mode<synchronous>, transform_indices = @transform_2, window_bounds = array<i64: 1, 32>}, {pipeline_mode = #tpu.pipeline_mode<synchronous>, transform_indices = @transform_3, window_bounds = array<i64: 32, 32>}, {pipeline_mode = #tpu.pipeline_mode<synchronous>, transform_indices = @transform_4, window_bounds = array<i64: 1, 32>}, {pipeline_mode = #tpu.pipeline_mode<synchronous>, transform_indices = @transform_5, window_bounds = array<i64: 32, 32>}, {pipeline_mode = #tpu.pipeline_mode<synchronous>, transform_indices = @transform_6, window_bounds = array<i64: 1, 32>}, {pipeline_mode = #tpu.pipeline_mode<synchronous>, transform_indices = @transform_7, window_bounds = array<i64: 1, 32>}, {pipeline_mode = #tpu.pipeline_mode<synchronous>, transform_indices = @transform_8, window_bounds = array<i64: 1, 32>}, {transform_indices = @transform_9, window_bounds = array<i64: 8, 32>}]} {
    %c0 = arith.constant 0 : index
    %c0_0 = arith.constant 0 : index
    %0 = vector.load %arg1[%c0, %c0_0] : memref<8x32xf32, #tpu.memory_space<vmem>>, vector<8x32xf32>
    %c0_1 = arith.constant 0 : index
    %c0_2 = arith.constant 0 : index
    %1 = vector.load %arg3[%c0_1, %c0_2] : memref<1x32xf32, #tpu.memory_space<vmem>>, vector<1x32xf32>
    %c0_3 = arith.constant 0 : index
    %c0_4 = arith.constant 0 : index
    %2 = vector.load %arg5[%c0_3, %c0_4] : memref<1x32xf32, #tpu.memory_space<vmem>>, vector<1x32xf32>
    %c0_5 = arith.constant 0 : index
    %c0_6 = arith.constant 0 : index
    %3 = vector.load %arg7[%c0_5, %c0_6] : memref<1x32xf32, #tpu.memory_space<vmem>>, vector<1x32xf32>
    %c0_7 = arith.constant 0 : index
    %c0_8 = arith.constant 0 : index
    %4 = vector.load %arg8[%c0_7, %c0_8] : memref<1x32xf32, #tpu.memory_space<vmem>>, vector<1x32xf32>
    %c0_9 = arith.constant 0 : index
    %c0_10 = arith.constant 0 : index
    %5 = vector.load %arg9[%c0_9, %c0_10] : memref<1x32xf32, #tpu.memory_space<vmem>>, vector<1x32xf32>
    %6 = arith.truncf %0 : vector<8x32xf32> to vector<8x32xbf16>
    %c0_11 = arith.constant 0 : index
    %c0_12 = arith.constant 0 : index
    %7 = vector.load %arg2[%c0_11, %c0_12] : memref<32x32xbf16, #tpu.memory_space<vmem>>, vector<32x32xbf16>
    %cst = arith.constant dense<0.000000e+00> : vector<8x32xf32>
    %8 = tpu.matmul %6, %7, %cst {dimension_numbers = #tpu.dot_dimension_numbers<[1], [0], [0], [1], [0, 0, 1, 1], [], []>} : vector<8x32xbf16>, vector<32x32xbf16>, vector<8x32xf32> -> vector<8x32xf32>
    %9 = vector.broadcast %1 : vector<1x32xf32> to vector<8x32xf32>
    %10 = arith.addf %8, %9 : vector<8x32xf32>
    %cst_13 = arith.constant 0.000000e+00 : f32
    %11 = vector.broadcast %cst_13 : f32 to vector<8x32xf32>
    %12 = arith.maximumf %10, %11 : vector<8x32xf32>
    %13 = arith.truncf %12 : vector<8x32xf32> to vector<8x32xbf16>
    %c0_14 = arith.constant 0 : index
    %c0_15 = arith.constant 0 : index
    %14 = vector.load %arg4[%c0_14, %c0_15] : memref<32x32xbf16, #tpu.memory_space<vmem>>, vector<32x32xbf16>
    %cst_16 = arith.constant dense<0.000000e+00> : vector<8x32xf32>
    %15 = tpu.matmul %13, %14, %cst_16 {dimension_numbers = #tpu.dot_dimension_numbers<[1], [0], [0], [1], [0, 0, 1, 1], [], []>} : vector<8x32xbf16>, vector<32x32xbf16>, vector<8x32xf32> -> vector<8x32xf32>
    %16 = vector.broadcast %2 : vector<1x32xf32> to vector<8x32xf32>
    %17 = arith.addf %15, %16 : vector<8x32xf32>
    %cst_17 = arith.constant 0.000000e+00 : f32
    %18 = vector.broadcast %cst_17 : f32 to vector<8x32xf32>
    %19 = arith.maximumf %17, %18 : vector<8x32xf32>
    %20 = arith.truncf %19 : vector<8x32xf32> to vector<8x32xbf16>
    %c0_18 = arith.constant 0 : index
    %c0_19 = arith.constant 0 : index
    %21 = vector.load %arg6[%c0_18, %c0_19] : memref<32x32xbf16, #tpu.memory_space<vmem>>, vector<32x32xbf16>
    %cst_20 = arith.constant dense<0.000000e+00> : vector<8x32xf32>
    %22 = tpu.matmul %20, %21, %cst_20 {dimension_numbers = #tpu.dot_dimension_numbers<[1], [0], [0], [1], [0, 0, 1, 1], [], []>} : vector<8x32xbf16>, vector<32x32xbf16>, vector<8x32xf32> -> vector<8x32xf32>
    %23 = vector.broadcast %3 : vector<1x32xf32> to vector<8x32xf32>
    %24 = arith.addf %22, %23 : vector<8x32xf32>
    %25 = arith.addf %24, %0 : vector<8x32xf32>
    %cst_21 = arith.constant dense<0.000000e+00> : vector<8xf32>
    %26 = vector.multi_reduction <add>, %25, %cst_21 [1] : vector<8x32xf32> to vector<8xf32>
    %27 = vector.shape_cast %26 : vector<8xf32> to vector<8x1xf32>
    %cst_22 = arith.constant 3.125000e-02 : f32
    %28 = vector.broadcast %cst_22 : f32 to vector<8x1xf32>
    %29 = arith.mulf %27, %28 : vector<8x1xf32>
    %30 = vector.broadcast %29 : vector<8x1xf32> to vector<8x32xf32>
    %31 = arith.subf %25, %30 : vector<8x32xf32>
    %32 = arith.mulf %31, %31 : vector<8x32xf32>
    %cst_23 = arith.constant dense<0.000000e+00> : vector<8xf32>
    %33 = vector.multi_reduction <add>, %32, %cst_23 [1] : vector<8x32xf32> to vector<8xf32>
    %34 = vector.shape_cast %33 : vector<8xf32> to vector<8x1xf32>
    %cst_24 = arith.constant 3.125000e-02 : f32
    %35 = vector.broadcast %cst_24 : f32 to vector<8x1xf32>
    %36 = arith.mulf %34, %35 : vector<8x1xf32>
    %cst_25 = arith.constant 9.99999974E-6 : f32
    %37 = vector.broadcast %cst_25 : f32 to vector<8x1xf32>
    %38 = arith.addf %36, %37 : vector<8x1xf32>
    %39 = math.rsqrt %38 : vector<8x1xf32>
    %40 = vector.broadcast %39 : vector<8x1xf32> to vector<8x32xf32>
    %41 = arith.mulf %31, %40 : vector<8x32xf32>
    %42 = vector.broadcast %4 : vector<1x32xf32> to vector<8x32xf32>
    %43 = arith.mulf %41, %42 : vector<8x32xf32>
    %44 = vector.broadcast %5 : vector<1x32xf32> to vector<8x32xf32>
    %45 = arith.addf %43, %44 : vector<8x32xf32>
    %c0_26 = arith.constant 0 : index
    %c0_27 = arith.constant 0 : index
    %46 = vector.load %arg10[%c0_26, %c0_27] : memref<8x32xf32, #tpu.memory_space<vmem>>, vector<8x32xf32>
    tpu.vector_store %arg10[%c0_26, %c0_27], %45 {strides = array<i32>} : memref<8x32xf32, #tpu.memory_space<vmem>>, vector<8x32xf32>,
    return
  }
  func.func @transform_0(%arg0: i32) -> (i32, i32) {
    %c0_i32 = arith.constant 0 : i32
    %c0_i32_0 = arith.constant 0 : i32
    return %arg0, %c0_i32 : i32, i32
  }
  func.func @transform_1(%arg0: i32) -> (i32, i32) {
    %c0_i32 = arith.constant 0 : i32
    %c0_i32_0 = arith.constant 0 : i32
    %c0_i32_1 = arith.constant 0 : i32
    return %c0_i32, %c0_i32_0 : i32, i32
  }
  func.func @transform_2(%arg0: i32) -> (i32, i32) {
    %c0_i32 = arith.constant 0 : i32
    %c0_i32_0 = arith.constant 0 : i32
    %c0_i32_1 = arith.constant 0 : i32
    return %c0_i32, %c0_i32_0 : i32, i32
  }
  func.func @transform_3(%arg0: i32) -> (i32, i32) {
    %c0_i32 = arith.constant 0 : i32
    %c0_i32_0 = arith.constant 0 : i32
    %c0_i32_1 = arith.constant 0 : i32
    return %c0_i32, %c0_i32_0 : i32, i32
  }
  func.func @transform_4(%arg0: i32) -> (i32, i32) {
    %c0_i32 = arith.constant 0 : i32
    %c0_i32_0 = arith.constant 0 : i32
    %c0_i32_1 = arith.constant 0 : i32
    return %c0_i32, %c0_i32_0 : i32, i32
  }
  func.func @transform_5(%arg0: i32) -> (i32, i32) {
    %c0_i32 = arith.constant 0 : i32
    %c0_i32_0 = arith.constant 0 : i32
    %c0_i32_1 = arith.constant 0 : i32
    return %c0_i32, %c0_i32_0 : i32, i32
  }
  func.func @transform_6(%arg0: i32) -> (i32, i32) {
    %c0_i32 = arith.constant 0 : i32
    %c0_i32_0 = arith.constant 0 : i32
    %c0_i32_1 = arith.constant 0 : i32
    return %c0_i32, %c0_i32_0 : i32, i32
  }
  func.func @transform_7(%arg0: i32) -> (i32, i32) {
    %c0_i32 = arith.constant 0 : i32
    %c0_i32_0 = arith.constant 0 : i32
    %c0_i32_1 = arith.constant 0 : i32
    return %c0_i32, %c0_i32_0 : i32, i32
  }
  func.func @transform_8(%arg0: i32) -> (i32, i32) {
    %c0_i32 = arith.constant 0 : i32
    %c0_i32_0 = arith.constant 0 : i32
    %c0_i32_1 = arith.constant 0 : i32
    return %c0_i32, %c0_i32_0 : i32, i32
  }
  func.func @transform_9(%arg0: i32) -> (i32, i32) {
    %c0_i32 = arith.constant 0 : i32
    %c0_i32_0 = arith.constant 0 : i32
    return %arg0, %c0_i32 : i32, i32
  }
}

</mosaic_0001>

<llo_original>
// kernel: structure_module_transition.1
$region0: #{structure_module_transition.1}
  #allocation0 [shape = 'u32[]', space=smem, size = 0x4, offset = 0x4, fixed_abs, tag = 'smem constant byte address 0x4 - core index']
  #allocation1 [shape = 'u32[144,128]{1,0:T(1,128)}', space=vmem, size = 0x12000, scoped, tag = 'internal scratch']
  %s0 = inlined_call_operand.vmem [shape: f32[16,32], index: 0, kind: input, shape index: {}]
  %s1 = inlined_call_operand.vmem [shape: bf16[32,32], index: 1, kind: input, shape index: {}]
  %s2 = inlined_call_operand.vmem [shape: f32[1,32], index: 2, kind: input, shape index: {}]
  %s3 = inlined_call_operand.vmem [shape: bf16[32,32], index: 3, kind: input, shape index: {}]
  %s4 = inlined_call_operand.vmem [shape: f32[1,32], index: 4, kind: input, shape index: {}]
  %s5 = inlined_call_operand.vmem [shape: bf16[32,32], index: 5, kind: input, shape index: {}]
  %s6 = inlined_call_operand.vmem [shape: f32[1,32], index: 6, kind: input, shape index: {}]
  %s7 = inlined_call_operand.vmem [shape: f32[1,32], index: 7, kind: input, shape index: {}]
  %s8 = inlined_call_operand.vmem [shape: f32[1,32], index: 8, kind: input, shape index: {}]
  %s9 = inlined_call_operand.hbm [shape: f32[16,32], index: 9, kind: output, shape index: {}]
  %s10 = sld [smem:[#allocation0]]
  $region69: #{structure_module_transition.1} parent=0
    _
  %s12 = ssub.s32 1, %s10
  %s13 = scalar_select 0, %s12, %s10
  $region1: #{structure_module_transition.1} parent=0
    #allocation2 [shape = 'u8[8192]{0}', space=vmem, size = 0x2000, scoped, tag = 'output window, operand 0']
    #allocation3 [shape = 's32[2]{0}', space=sflag, size = 0x8, scoped, tag = 'scoped memory for structure_module_transition.1']
    %14 = vsyncpa [#allocation3], 0
    %s15 = scalar_lea.sflag [#allocation3], 1
    %16 = vsyncpa %s15, 0
    loop: start=0, step=1, limit=4
    $region2: #{structure_module_transition.1} parent=1 // loop_pre_header
      _
    $region3: #{structure_module_transition.1} parent=1 // loop_header
      %s18 = sphi 0, %s22
      %p19 = scmp.ge.s32.totalorder %s18, 4
      %s28 = sphi 0, %s30
      %s31 = sphi 0, %s28
      %s32 = sphi 0, %s31
      %s48 = sphi 0, %s32
      %s52 = sphi 0, %s52
      %s54 = sphi 0, %s52
      %s55 = sphi 0, %s54
      %s69 = sphi 0, %s55
      %s73 = sphi 0, %s73
      %s75 = sphi 0, %s73
      %s76 = sphi 0, %s75
      %s90 = sphi 0, %s76
      %s94 = sphi 0, %s94
      %s96 = sphi 0, %s94
      %s97 = sphi 0, %s96
      %s111 = sphi 0, %s97
      %s115 = sphi 0, %s115
      %s117 = sphi 0, %s115
      %s118 = sphi 0, %s117
      %s132 = sphi 0, %s118
      %s136 = sphi 0, %s136
      %s138 = sphi 0, %s136
      %s139 = sphi 0, %s138
      %s153 = sphi 0, %s139
      %s157 = sphi 0, %s157
      %s159 = sphi 0, %s157
      %s160 = sphi 0, %s159
      %s174 = sphi 0, %s160
      %s178 = sphi 0, %s178
      %s180 = sphi 0, %s178
      %s181 = sphi 0, %s180
      %s195 = sphi 0, %s181
      %s199 = sphi 0, %s199
      %s201 = sphi 0, %s199
      %s202 = sphi 0, %s201
      %s216 = sphi 0, %s202
      %s222 = sphi 0, %s224
      %s225 = sphi 0, %s222
      %s226 = sphi 0, %s225
      %s242 = sphi 0, %s226
    $region4: #{structure_module_transition.1} parent=1 // loop_header_branch
      %21 = sbr.rel (%p19) target = $region8
    $region5: #{structure_module_transition.1} parent=1 // loop_body
      %s23 = ssub.s32 %s18, 1
      %s24 = ssub.s32 %s18, 2
      %s25 = sadd.s32 %s18, 1
      %s26 = ssub.s32 %s18, %s25
      %p27 = scmp.eq.s32.totalorder %s26, 0
      %s29 = sadd.s32 %s28, 1
      %s30 = scalar_select %p27, %s28, %s29
      %p33 = pneg %p27
      %p34 = scmp.eq.s32.totalorder %s18, 1
      %p35 = por %p33, %p34
      %p36 = scmp.ne.s32.totalorder %s28, %s31
      %p37 = scmp.eq.s32.totalorder %s18, 0
      %p38 = por %p36, %p37
      %p39 = scmp.ne.s32.totalorder %s28, %s31
      %p40 = scmp.eq.s32.totalorder %s23, 1
      %p41 = por %p39, %p40
      %p42 = scmp.ne.s32.totalorder %s31, %s32
      %p43 = scmp.eq.s32.totalorder %s23, 0
      %p44 = por %p42, %p43
      %p45 = scmp.ne.s32.totalorder %s31, %s32
      %p46 = scmp.eq.s32.totalorder %s24, 1
      %p47 = por %p45, %p46
      %p49 = scmp.ne.s32.totalorder %s32, %s48
      %p50 = scmp.eq.s32.totalorder %s24, 0
      %p51 = por %p49, %p50
      %s53 = sadd.s32 %s52, 1
      %p56 = scmp.eq.s32.totalorder %s18, 1
      %p57 = scmp.ne.s32.totalorder %s52, %s54
      %p58 = scmp.eq.s32.totalorder %s18, 0
      %p59 = por %p57, %p58
      %p60 = scmp.ne.s32.totalorder %s52, %s54
      %p61 = scmp.eq.s32.totalorder %s23, 1
      %p62 = por %p60, %p61
      %p63 = scmp.ne.s32.totalorder %s54, %s55
      %p64 = scmp.eq.s32.totalorder %s23, 0
      %p65 = por %p63, %p64
      %p66 = scmp.ne.s32.totalorder %s54, %s55
      %p67 = scmp.eq.s32.totalorder %s24, 1
      %p68 = por %p66, %p67
      %p70 = scmp.ne.s32.totalorder %s55, %s69
      %p71 = scmp.eq.s32.totalorder %s24, 0
      %p72 = por %p70, %p71
      %s74 = sadd.s32 %s73, 1
      %p77 = scmp.eq.s32.totalorder %s18, 1
      %p78 = scmp.ne.s32.totalorder %s73, %s75
      %p79 = scmp.eq.s32.totalorder %s18, 0
      %p80 = por %p78, %p79
      %p81 = scmp.ne.s32.totalorder %s73, %s75
      %p82 = scmp.eq.s32.totalorder %s23, 1
      %p83 = por %p81, %p82
      %p84 = scmp.ne.s32.totalorder %s75, %s76
      %p85 = scmp.eq.s32.totalorder %s23, 0
      %p86 = por %p84, %p85
      %p87 = scmp.ne.s32.totalorder %s75, %s76
      %p88 = scmp.eq.s32.totalorder %s24, 1
      %p89 = por %p87, %p88
      %p91 = scmp.ne.s32.totalorder %s76, %s90
      %p92 = scmp.eq.s32.totalorder %s24, 0
      %p93 = por %p91, %p92
      %s95 = sadd.s32 %s94, 1
      %p98 = scmp.eq.s32.totalorder %s18, 1
      %p99 = scmp.ne.s32.totalorder %s94, %s96
      %p100 = scmp.eq.s32.totalorder %s18, 0
      %p101 = por %p99, %p100
      %p102 = scmp.ne.s32.totalorder %s94, %s96
      %p103 = scmp.eq.s32.totalorder %s23, 1
      %p104 = por %p102, %p103
      %p105 = scmp.ne.s32.totalorder %s96, %s97
      %p106 = scmp.eq.s32.totalorder %s23, 0
      %p107 = por %p105, %p106
      %p108 = scmp.ne.s32.totalorder %s96, %s97
      %p109 = scmp.eq.s32.totalorder %s24, 1
      %p110 = por %p108, %p109
      %p112 = scmp.ne.s32.totalorder %s97, %s111
      %p113 = scmp.eq.s32.totalorder %s24, 0
      %p114 = por %p112, %p113
      %s116 = sadd.s32 %s115, 1
      %p119 = scmp.eq.s32.totalorder %s18, 1
      %p120 = scmp.ne.s32.totalorder %s115, %s117
      %p121 = scmp.eq.s32.totalorder %s18, 0
      %p122 = por %p120, %p121
      %p123 = scmp.ne.s32.totalorder %s115, %s117
      %p124 = scmp.eq.s32.totalorder %s23, 1
      %p125 = por %p123, %p124
      %p126 = scmp.ne.s32.totalorder %s117, %s118
      %p127 = scmp.eq.s32.totalorder %s23, 0
      %p128 = por %p126, %p127
      %p129 = scmp.ne.s32.totalorder %s117, %s118
      %p130 = scmp.eq.s32.totalorder %s24, 1
      %p131 = por %p129, %p130
      %p133 = scmp.ne.s32.totalorder %s118, %s132
      %p134 = scmp.eq.s32.totalorder %s24, 0
      %p135 = por %p133, %p134
      %s137 = sadd.s32 %s136, 1
      %p140 = scmp.eq.s32.totalorder %s18, 1
      %p141 = scmp.ne.s32.totalorder %s136, %s138
      %p142 = scmp.eq.s32.totalorder %s18, 0
      %p143 = por %p141, %p142
      %p144 = scmp.ne.s32.totalorder %s136, %s138
      %p145 = scmp.eq.s32.totalorder %s23, 1
      %p146 = por %p144, %p145
      %p147 = scmp.ne.s32.totalorder %s138, %s139
      %p148 = scmp.eq.s32.totalorder %s23, 0
      %p149 = por %p147, %p148
      %p150 = scmp.ne.s32.totalorder %s138, %s139
      %p151 = scmp.eq.s32.totalorder %s24, 1
      %p152 = por %p150, %p151
      %p154 = scmp.ne.s32.totalorder %s139, %s153
      %p155 = scmp.eq.s32.totalorder %s24, 0
      %p156 = por %p154, %p155
      %s158 = sadd.s32 %s157, 1
      %p161 = scmp.eq.s32.totalorder %s18, 1
      %p162 = scmp.ne.s32.totalorder %s157, %s159
      %p163 = scmp.eq.s32.totalorder %s18, 0
      %p164 = por %p162, %p163
      %p165 = scmp.ne.s32.totalorder %s157, %s159
      %p166 = scmp.eq.s32.totalorder %s23, 1
      %p167 = por %p165, %p166
      %p168 = scmp.ne.s32.totalorder %s159, %s160
      %p169 = scmp.eq.s32.totalorder %s23, 0
      %p170 = por %p168, %p169
      %p171 = scmp.ne.s32.totalorder %s159, %s160
      %p172 = scmp.eq.s32.totalorder %s24, 1
      %p173 = por %p171, %p172
      %p175 = scmp.ne.s32.totalorder %s160, %s174
      %p176 = scmp.eq.s32.totalorder %s24, 0
      %p177 = por %p175, %p176
      %s179 = sadd.s32 %s178, 1
      %p182 = scmp.eq.s32.totalorder %s18, 1
      %p183 = scmp.ne.s32.totalorder %s178, %s180
      %p184 = scmp.eq.s32.totalorder %s18, 0
      %p185 = por %p183, %p184
      %p186 = scmp.ne.s32.totalorder %s178, %s180
      %p187 = scmp.eq.s32.totalorder %s23, 1
      %p188 = por %p186, %p187
      %p189 = scmp.ne.s32.totalorder %s180, %s181
      %p190 = scmp.eq.s32.totalorder %s23, 0
      %p191 = por %p189, %p190
      %p192 = scmp.ne.s32.totalorder %s180, %s181
      %p193 = scmp.eq.s32.totalorder %s24, 1
      %p194 = por %p192, %p193
      %p196 = scmp.ne.s32.totalorder %s181, %s195
      %p197 = scmp.eq.s32.totalorder %s24, 0
      %p198 = por %p196, %p197
      %s200 = sadd.s32 %s199, 1
      %p203 = scmp.eq.s32.totalorder %s18, 1
      %p204 = scmp.ne.s32.totalorder %s199, %s201
      %p205 = scmp.eq.s32.totalorder %s18, 0
      %p206 = por %p204, %p205
      %p207 = scmp.ne.s32.totalorder %s199, %s201
      %p208 = scmp.eq.s32.totalorder %s23, 1
      %p209 = por %p207, %p208
      %p210 = scmp.ne.s32.totalorder %s201, %s202
      %p211 = scmp.eq.s32.totalorder %s23, 0
      %p212 = por %p210, %p211
      %p213 = scmp.ne.s32.totalorder %s201, %s202
      %p214 = scmp.eq.s32.totalorder %s24, 1
      %p215 = por %p213, %p214
      %p217 = scmp.ne.s32.totalorder %s202, %s216
      %p218 = scmp.eq.s32.totalorder %s24, 0
      %p219 = por %p217, %p218
      %s220 = ssub.s32 %s18, %s25
      %p221 = scmp.eq.s32.totalorder %s220, 0
      %s223 = sadd.s32 %s222, 1
      %s224 = scalar_select %p221, %s222, %s223
      %p227 = pneg %p221
      %p228 = scmp.eq.s32.totalorder %s18, 1
      %p229 = por %p227, %p228
      %p230 = scmp.ne.s32.totalorder %s222, %s225
      %p231 = scmp.eq.s32.totalorder %s18, 0
      %p232 = por %p230, %p231
      %p233 = scmp.ne.s32.totalorder %s222, %s225
      %p234 = scmp.eq.s32.totalorder %s23, 1
      %p235 = por %p233, %p234
      %p236 = scmp.ne.s32.totalorder %s225, %s226
      %p237 = scmp.eq.s32.totalorder %s23, 0
      %p238 = por %p236, %p237
      %p239 = scmp.ne.s32.totalorder %s225, %s226
      %p240 = scmp.eq.s32.totalorder %s24, 1
      %p241 = por %p239, %p240
      %p243 = scmp.ne.s32.totalorder %s226, %s242
      %p244 = scmp.eq.s32.totalorder %s24, 0
      %p245 = por %p243, %p244
      %p246 = scmp.le.s32.totalorder 1, %s18
      %p247 = scmp.lt.s32.totalorder %s18, 3
      %p248 = pnand %p246, %p247
      %p249 = pneg %p248
      // Predicated region
      $region9: #{structure_module_transition.1} parent=5 // pred_check
        _
      $region10: #{structure_module_transition.1} parent=5 // pred_check_branch
        %251 = sbr.rel (%p248) target = $region12
      $region11: #{structure_module_transition.1} parent=5 // pred_region
        %s252 = ssub.s32 %s18, 1
        // Predicated region
        $region13: #{structure_module_transition.1} parent=11 // pred_check
          %p253 = pneg %p65
        $region14: #{structure_module_transition.1} parent=11 // pred_check_branch
          %255 = sbr.rel (%p253) target = $region16
        $region15: #{structure_module_transition.1} parent=11 // pred_region
          _
        $region16: #{structure_module_transition.1} parent=11 // pred_fallthru
          _
        // Predicated region
        $region17: #{structure_module_transition.1} parent=11 // pred_check
          %p256 = pneg %p86
        $region18: #{structure_module_transition.1} parent=11 // pred_check_branch
          %258 = sbr.rel (%p256) target = $region20
        $region19: #{structure_module_transition.1} parent=11 // pred_region
          _
        $region20: #{structure_module_transition.1} parent=11 // pred_fallthru
          _
        // Predicated region
        $region21: #{structure_module_transition.1} parent=11 // pred_check
          %p259 = pneg %p107
        $region22: #{structure_module_transition.1} parent=11 // pred_check_branch
          %261 = sbr.rel (%p259) target = $region24
        $region23: #{structure_module_transition.1} parent=11 // pred_region
          _
        $region24: #{structure_module_transition.1} parent=11 // pred_fallthru
          _
        // Predicated region
        $region25: #{structure_module_transition.1} parent=11 // pred_check
          %p262 = pneg %p128
        $region26: #{structure_module_transition.1} parent=11 // pred_check_branch
          %264 = sbr.rel (%p262) target = $region28
        $region27: #{structure_module_transition.1} parent=11 // pred_region
          _
        $region28: #{structure_module_transition.1} parent=11 // pred_fallthru
          _
        // Predicated region
        $region29: #{structure_module_transition.1} parent=11 // pred_check
          %p265 = pneg %p149
        $region30: #{structure_module_transition.1} parent=11 // pred_check_branch
          %267 = sbr.rel (%p265) target = $region32
        $region31: #{structure_module_transition.1} parent=11 // pred_region
          _
        $region32: #{structure_module_transition.1} parent=11 // pred_fallthru
          _
        // Predicated region
        $region33: #{structure_module_transition.1} parent=11 // pred_check
          %p268 = pneg %p170
        $region34: #{structure_module_transition.1} parent=11 // pred_check_branch
          %270 = sbr.rel (%p268) target = $region36
        $region35: #{structure_module_transition.1} parent=11 // pred_region
          _
        $region36: #{structure_module_transition.1} parent=11 // pred_fallthru
          _
        // Predicated region
        $region37: #{structure_module_transition.1} parent=11 // pred_check
          %p271 = pneg %p191
        $region38: #{structure_module_transition.1} parent=11 // pred_check_branch
          %273 = sbr.rel (%p271) target = $region40
        $region39: #{structure_module_transition.1} parent=11 // pred_region
          _
        $region40: #{structure_module_transition.1} parent=11 // pred_fallthru
          _
        // Predicated region
        $region41: #{structure_module_transition.1} parent=11 // pred_check
          %p274 = pneg %p212
        $region42: #{structure_module_transition.1} parent=11 // pred_check_branch
          %276 = sbr.rel (%p274) target = $region44
        $region43: #{structure_module_transition.1} parent=11 // pred_region
          _
        $region44: #{structure_module_transition.1} parent=11 // pred_fallthru
          _
      $region12: #{structure_module_transition.1} parent=5 // pred_fallthru
        _
      %p277 = scmp.lt.s32.totalorder %s18, 2
      // Predicated region
      $region45: #{structure_module_transition.1} parent=5 // pred_check
        %p278 = pneg %p277
      $region46: #{structure_module_transition.1} parent=5 // pred_check_branch
        %280 = sbr.rel (%p278) target = $region48
      $region47: #{structure_module_transition.1} parent=5 // pred_region
        // Predicated region
        $region49: #{structure_module_transition.1} parent=47 // pred_check
          %p281 = pneg %p38
        $region50: #{structure_module_transition.1} parent=47 // pred_check_branch
          %283 = sbr.rel (%p281) target = $region52
        $region51: #{structure_module_transition.1} parent=47 // pred_region
          %p284 = scmp.lt.s32.totalorder %s18, 1
          %s285 = scalar_select %p284, %s18, 1
          %s286 = smul.addr %s285, 8
          %s287 = scalar_lea.vmem %s0, %s286
        $region52: #{structure_module_transition.1} parent=47 // pred_fallthru
          _
      $region48: #{structure_module_transition.1} parent=5 // pred_fallthru
        _
      %p288 = scmp.le.s32.totalorder 1, %s18
      %p289 = scmp.lt.s32.totalorder %s18, 3
      %p290 = pnand %p288, %p289
      %p291 = pneg %p290
      // Predicated region
      $region53: #{structure_module_transition.1} parent=5 // pred_check
        _
      $region54: #{structure_module_transition.1} parent=5 // pred_check_branch
        %293 = sbr.rel (%p290) target = $region56
      $region55: #{structure_module_transition.1} parent=5 // pred_region
        %s294 = ssub.s32 %s18, 1
        %p295 = scmp.lt.s32.totalorder %s23, 1
        %s296 = scalar_select %p295, %s23, 1
        %s297 = smul.addr %s296, 8
        %s298 = scalar_lea.vmem %s0, %s297
        %p299 = pneg %p44
        %p300 = pneg %p41
        %p301 = pneg %p65
        %p302 = pneg %p62
        %p303 = pneg %p86
        %p304 = pneg %p83
        %p305 = pneg %p107
        %p306 = pneg %p104
        %p307 = pneg %p128
        %p308 = pneg %p125
        %p309 = pneg %p149
        %p310 = pneg %p146
        %p311 = pneg %p170
        %p312 = pneg %p167
        %p313 = pneg %p191
        %p314 = pneg %p188
        %p315 = pneg %p212
        %p316 = pneg %p209
        %p317 = pneg %p238
        %p318 = pneg %p235
        %s319 = sand.u32 %s225, 1
        %s320 = scalar_lea.sflag [#allocation3], %s319
        %s321 = sand.u32 %s225, 1
        %s322 = smul.addr %s321, 8
        %s323 = scalar_lea.vmem [#allocation2], %s322
        %p324 = scmp.lt.s32.totalorder %s23, 1
        %s325 = scalar_select %p324, %s23, 1
        %s326 = smul.addr %s325, 8
        %s327 = scalar_lea.vmem %s0, %s326
        %v329 = vld [vmem:[%s327] sm:$0xff]
        %v330 = vld [vmem:[%s2] sm:$0x1]
        %v331 = vld [vmem:[%s4] sm:$0x1]
        %v332 = vld [vmem:[%s6] sm:$0x1]
        %v333 = vld [vmem:[%s7] sm:$0x1]
        %v334 = vld [vmem:[%s8] sm:$0x1]
        %v335 = vpack.c.bf16 %v329, %v329
        %v336 = vld [vmem:[%s1] sm:$0xf]
        %v337 = vld [vmem:[%s1 + $0x4] sm:$0xf]
        %v338 = vld [vmem:[%s1 + $0x8] sm:$0xf]
        %v339 = vld [vmem:[%s1 + $0xc] sm:$0xf]
        %v341 = vlaneseq
        %v342 = vshrl.u32 %v341, 7
        %v343 = vsub.s32 0, %v342
        %v344 = vrot.slane %v330, %v343
        %v350 = vunpack.c.l.b16 %v336
        %v351 = vunpack.c.l.b16 %v337
        %v352 = vunpack.c.l.b16 %v338
        %v353 = vunpack.c.l.b16 %v339
        %v354 = vpack.c.b16 %v351, %v350
        %v355 = vpack.c.b16 %v353, %v352
        %vm358 = vcmask 261120
        %v360 = vsel %vm358, %v335, 0
        %362 = vmatprep.subr.bf16.mxu0 0
        %363 = vmatpush1.bf16.msra.mxu0 0
        %364 = vmatprep.subr.bf16.mxu0 0
        %365 = vmatpush1.bf16.msra.mxu0 0
        %366 = vmatprep.subr.bf16.mxu0 0
        %367 = vmatpush1.bf16.msra.mxu0 0
        %368 = vmatprep.subr.bf16.mxu0 0
        %369 = vmatpush1.bf16.msra.mxu0 0
        %370 = vmatprep.subr.bf16.mxu0 0
        %371 = vmatpush1.bf16.msra.mxu0 0
        %372 = vmatprep.subr.bf16.mxu0 0
        %373 = vmatpush1.bf16.msra.mxu0 0
        %374 = vmatprep.subr.bf16.mxu0 0
        %375 = vmatpush1.bf16.msra.mxu0 %v355
        %376 = vmatprep.subr.bf16.mxu0 0
        %377 = vmatpush1.bf16.msra.mxu0 %v354
        %378 = vmatprep.subr.bf16.mxu0 0
        %379 = vmatpush2.bf16.msra.mxu0 0
        %380 = vmatprep.subr.bf16.mxu0 0
        %381 = vmatpush2.bf16.msra.mxu0 0
        %382 = vmatprep.subr.bf16.mxu0 0
        %383 = vmatpush2.bf16.msra.mxu0 0
        %384 = vmatprep.subr.bf16.mxu0 0
        %385 = vmatpush2.bf16.msra.mxu0 0
        %386 = vmatprep.subr.bf16.mxu0 0
        %387 = vmatpush2.bf16.msra.mxu0 0
        %388 = vmatprep.subr.bf16.mxu0 0
        %389 = vmatpush2.bf16.msra.mxu0 0
        %390 = vmatprep.subr.bf16.mxu0 0
        %391 = vmatpush2.bf16.msra.mxu0 0
        %392 = vmatprep.subr.bf16.mxu0 0
        %393 = vmatpush2.bf16.msra.mxu0 0
        %394 = vmatprep.mubr.bf16.mxu0 0
        %395 = vmatmul.mubr.bf16.gmra.mxu0 %v360
        %v396 = vpop.f32.mrf.mxu0
        %v397 = vadd.f32 %v344, %v396
        %v398 = vpop.f32.mrf.mxu0
        %v399 = vpop.f32.mrf.mxu0
        %v400 = vpop.f32.mrf.mxu0
        %401 = vdwg.mxu0
        %v402 = vmax.f32 %v397, 0.0
        %v403 = vpack.c.bf16 %v402, %v402
        %v404 = vld [vmem:[%s3] sm:$0xf]
        %v405 = vld [vmem:[%s3 + $0x4] sm:$0xf]
        %v406 = vld [vmem:[%s3 + $0x8] sm:$0xf]
        %v407 = vld [vmem:[%s3 + $0xc] sm:$0xf]
        %v409 = vlaneseq
        %v410 = vshrl.u32 %v409, 7
        %v411 = vsub.s32 0, %v410
        %v412 = vrot.slane %v331, %v411
        %v418 = vunpack.c.l.b16 %v404
        %v419 = vunpack.c.l.b16 %v405
        %v420 = vunpack.c.l.b16 %v406
        %v421 = vunpack.c.l.b16 %v407
        %v422 = vpack.c.b16 %v419, %v418
        %v423 = vpack.c.b16 %v421, %v420
        %v427 = vsel %vm358, %v403, 0
        %429 = vmatprep.subr.bf16.mxu0 0
        %430 = vmatpush1.bf16.msra.mxu0 0
        %431 = vmatprep.subr.bf16.mxu0 0
        %432 = vmatpush1.bf16.msra.mxu0 0
        %433 = vmatprep.subr.bf16.mxu0 0
        %434 = vmatpush1.bf16.msra.mxu0 0
        %435 = vmatprep.subr.bf16.mxu0 0
        %436 = vmatpush1.bf16.msra.mxu0 0
        %437 = vmatprep.subr.bf16.mxu0 0
        %438 = vmatpush1.bf16.msra.mxu0 0
        %439 = vmatprep.subr.bf16.mxu0 0
        %440 = vmatpush1.bf16.msra.mxu0 0
        %441 = vmatprep.subr.bf16.mxu0 0
        %442 = vmatpush1.bf16.msra.mxu0 %v423
        %443 = vmatprep.subr.bf16.mxu0 0
        %444 = vmatpush1.bf16.msra.mxu0 %v422
        %445 = vmatprep.subr.bf16.mxu0 0
        %446 = vmatpush2.bf16.msra.mxu0 0
        %447 = vmatprep.subr.bf16.mxu0 0
        %448 = vmatpush2.bf16.msra.mxu0 0
        %449 = vmatprep.subr.bf16.mxu0 0
        %450 = vmatpush2.bf16.msra.mxu0 0
        %451 = vmatprep.subr.bf16.mxu0 0
        %452 = vmatpush2.bf16.msra.mxu0 0
        %453 = vmatprep.subr.bf16.mxu0 0
        %454 = vmatpush2.bf16.msra.mxu0 0
        %455 = vmatprep.subr.bf16.mxu0 0
        %456 = vmatpush2.bf16.msra.mxu0 0
        %457 = vmatprep.subr.bf16.mxu0 0
        %458 = vmatpush2.bf16.msra.mxu0 0
        %459 = vmatprep.subr.bf16.mxu0 0
        %460 = vmatpush2.bf16.msra.mxu0 0
        %461 = vmatprep.mubr.bf16.mxu0 0
        %462 = vmatmul.mubr.bf16.gmra.mxu0 %v427
        %v463 = vpop.f32.mrf.mxu0
        %v464 = vadd.f32 %v412, %v463
        %v465 = vpop.f32.mrf.mxu0
        %v466 = vpop.f32.mrf.mxu0
        %v467 = vpop.f32.mrf.mxu0
        %468 = vdwg.mxu0
        %v469 = vmax.f32 %v464, 0.0
        %v470 = vpack.c.bf16 %v469, %v469
        %v471 = vld [vmem:[%s5] sm:$0xf]
        %v472 = vld [vmem:[%s5 + $0x4] sm:$0xf]
        %v473 = vld [vmem:[%s5 + $0x8] sm:$0xf]
        %v474 = vld [vmem:[%s5 + $0xc] sm:$0xf]
        %v476 = vlaneseq
        %v477 = vshrl.u32 %v476, 7
        %v478 = vsub.s32 0, %v477
        %v479 = vrot.slane %v332, %v478
        %v485 = vunpack.c.l.b16 %v471
        %v486 = vunpack.c.l.b16 %v472
        %v487 = vunpack.c.l.b16 %v473
        %v488 = vunpack.c.l.b16 %v474
        %v489 = vpack.c.b16 %v486, %v485
        %v490 = vpack.c.b16 %v488, %v487
        %v494 = vsel %vm358, %v470, 0
        %496 = vmatprep.subr.bf16.mxu0 0
        %497 = vmatpush1.bf16.msra.mxu0 0
        %498 = vmatprep.subr.bf16.mxu0 0
        %499 = vmatpush1.bf16.msra.mxu0 0
        %500 = vmatprep.subr.bf16.mxu0 0
        %501 = vmatpush1.bf16.msra.mxu0 0
        %502 = vmatprep.subr.bf16.mxu0 0
        %503 = vmatpush1.bf16.msra.mxu0 0
        %504 = vmatprep.subr.bf16.mxu0 0
        %505 = vmatpush1.bf16.msra.mxu0 0
        %506 = vmatprep.subr.bf16.mxu0 0
        %507 = vmatpush1.bf16.msra.mxu0 0
        %508 = vmatprep.subr.bf16.mxu0 0
        %509 = vmatpush1.bf16.msra.mxu0 %v490
        %510 = vmatprep.subr.bf16.mxu0 0
        %511 = vmatpush1.bf16.msra.mxu0 %v489
        %512 = vmatprep.subr.bf16.mxu0 0
        %513 = vmatpush2.bf16.msra.mxu0 0
        %514 = vmatprep.subr.bf16.mxu0 0
        %515 = vmatpush2.bf16.msra.mxu0 0
        %516 = vmatprep.subr.bf16.mxu0 0
        %517 = vmatpush2.bf16.msra.mxu0 0
        %518 = vmatprep.subr.bf16.mxu0 0
        %519 = vmatpush2.bf16.msra.mxu0 0
        %520 = vmatprep.subr.bf16.mxu0 0
        %521 = vmatpush2.bf16.msra.mxu0 0
        %522 = vmatprep.subr.bf16.mxu0 0
        %523 = vmatpush2.bf16.msra.mxu0 0
        %524 = vmatprep.subr.bf16.mxu0 0
        %525 = vmatpush2.bf16.msra.mxu0 0
        %526 = vmatprep.subr.bf16.mxu0 0
        %527 = vmatpush2.bf16.msra.mxu0 0
        %528 = vmatprep.mubr.bf16.mxu0 0
        %529 = vmatmul.mubr.bf16.gmra.mxu0 %v494
        %v530 = vpop.f32.mrf.mxu0
        %v531 = vadd.f32 %v479, %v530
        %v532 = vpop.f32.mrf.mxu0
        %v533 = vpop.f32.mrf.mxu0
        %v534 = vpop.f32.mrf.mxu0
        %535 = vdwg.mxu0
        %v536 = vadd.f32 %v531, %v329
        %v537 = vsel %vm358, %v536, 0.0
        %538 = vadd.xlane.f32.xlu0 %v537
        %v539 = vpop.xlane.xlu0 %538
        %v540 = vmul.f32 %v539, 0.03125
        %v541 = vsub.f32 %v536, %v540
        %v542 = vmul.f32 %v541, %v541
        %v543 = vsel %vm358, %v542, 0.0
        %544 = vadd.xlane.f32.xlu0 %v543
        %v545 = vpop.xlane.xlu0 %544
        %v546 = vmul.f32 %v545, 0.03125
        %v547 = vadd.f32 %v546, 1e-05
        %v548 = vrsqrt.pop %v547
        %v549 = vmul.f32 %v541, %v548
        %v551 = vlaneseq
        %v552 = vshrl.u32 %v551, 7
        %v553 = vsub.s32 0, %v552
        %v554 = vrot.slane %v333, %v553
        %v556 = vmul.f32 %v549, %v554
        %v558 = vlaneseq
        %v559 = vshrl.u32 %v558, 7
        %v560 = vsub.s32 0, %v559
        %v561 = vrot.slane %v334, %v560
        %v563 = vadd.f32 %v556, %v561
        %564 = vst.msk [vmem:[%s323] sm:$0xff] %vm358, %v563
        %s565 = sand.u32 %s225, 1
        %s566 = scalar_lea.sflag [#allocation3], %s565
        %s567 = sand.u32 %s225, 1
        %s568 = smul.addr %s567, 8
        %s569 = scalar_lea.vmem [#allocation2], %s568
        // Predicated region
        $region57: #{structure_module_transition.1} parent=55 // pred_check
          %p570 = pneg %p235
        $region58: #{structure_module_transition.1} parent=55 // pred_check_branch
          %572 = sbr.rel (%p570) target = $region60
        $region59: #{structure_module_transition.1} parent=55 // pred_region
          %s574 = ssub.s32 128, 128
          %575 = vsyncadd %s566, %s574
          %s576 = smul.addr %s23, 128
          %s577 = scalar_lea.hbm %s9, %s576
          %s579 = sshll.u32 %s569, 4
          %s580 = int_to_ptr.vmem [resolvable:$true] %s579
          %582 = dma.vmem_to_hbm [thread:$0]  %s580, 128, %s577, %s566
        $region60: #{structure_module_transition.1} parent=55 // pred_fallthru
          _
      $region56: #{structure_module_transition.1} parent=5 // pred_fallthru
        _
      %p583 = scmp.le.s32.totalorder 2, %s18
      // Predicated region
      $region61: #{structure_module_transition.1} parent=5 // pred_check
        %p584 = pneg %p583
      $region62: #{structure_module_transition.1} parent=5 // pred_check_branch
        %586 = sbr.rel (%p584) target = $region64
      $region63: #{structure_module_transition.1} parent=5 // pred_region
        %s587 = ssub.s32 %s18, 2
        // Predicated region
        $region65: #{structure_module_transition.1} parent=63 // pred_check
          %p588 = pneg %p241
        $region66: #{structure_module_transition.1} parent=63 // pred_check_branch
          %590 = sbr.rel (%p588) target = $region68
        $region67: #{structure_module_transition.1} parent=63 // pred_region
          %s591 = sand.u32 %s226, 1
          %s592 = scalar_lea.sflag [#allocation3], %s591
          %s593 = sand.u32 %s226, 1
          %s594 = smul.addr %s593, 8
          %s595 = scalar_lea.vmem [#allocation2], %s594
          %596 = dma.done %s592, 128
        $region68: #{structure_module_transition.1} parent=63 // pred_fallthru
          _
      $region64: #{structure_module_transition.1} parent=5 // pred_fallthru
        _
    $region6: #{structure_module_transition.1} parent=1 // loop_footer
      %s22 = sadd.s32 1, %s18
    $region7: #{structure_module_transition.1} parent=1 // loop_footer_branch
      %17 = sbr.rel target = $region3
    $region8: #{structure_module_transition.1} parent=1 // loop_exit
      _
    %597 = vsyncpa [#allocation3], 1
    %s598 = scalar_lea.sflag [#allocation3], 1
    %599 = vsyncpa %s598, 1

</llo_original>
